<compile_context>
chip_gen: v7x
topology: tpu7x:2x2x1
jax: 0.10.0
libtpu: 0.0.40
codegen_flags: <defaults>
</compile_context>

<pallas_src>
import jax
import jax.numpy as jnp
from jax.experimental import pallas as pl
from jax.experimental.pallas import tpu as pltpu


def _round_up(x, m):
    return (x + m - 1) // m * m


def _gelu_tanh(x):
    # PyTorch F.gelu(x, approximate='tanh'):
    # 0.5 * x * (1 + tanh(sqrt(2/pi) * (x + 0.044715 * x^3)))
    c = 0.7978845608028654  # sqrt(2/pi)
    return 0.5 * x * (1.0 + jnp.tanh(c * (x + 0.044715 * x * x * x)))


def _gemma_mlp_kernel(x_ref, wg_ref, wu_ref, wd_ref, o_ref, acc_ref):
    k = pl.program_id(1)

    @pl.when(k == 0)
    def _():
        acc_ref[...] = jnp.zeros_like(acc_ref)

    x = x_ref[...]                                                       # [tm, H] bf16
    gate = jnp.dot(x, wg_ref[...], preferred_element_type=jnp.float32)   # [tm, ti] f32
    gate = _gelu_tanh(gate)                                              # f32 VPU/EUP
    up = jnp.dot(x, wu_ref[...], preferred_element_type=jnp.float32)     # [tm, ti] f32
    fuse = (gate * up).astype(wd_ref.dtype)                              # bf16 for MXU
    acc_ref[...] += jnp.dot(fuse, wd_ref[...],
                            preferred_element_type=jnp.float32)          # [tm, H] f32

    @pl.when(k == pl.num_programs(1) - 1)
    def _():
        o_ref[...] = acc_ref[...].astype(o_ref.dtype)


def gemma_mlp(x, w_gate, w_up, w_down, *, tm=256, ti=256):
    """x: [M, H]; w_gate/w_up: [H, I]; w_down: [I, H]. Returns [M, H] in x.dtype."""
    M, H = x.shape
    I = w_gate.shape[1]
    out_dtype = x.dtype

    # Clamp the row tile to the (padded) problem size; keep it MXU-aligned.
    tm = min(tm, _round_up(M, 128))
    # Intermediate tile: prefer multiples of 128 that divide I.
    ti = min(ti, I)
    if I % ti != 0:
        cands = [t for t in range(ti, 0, -128) if t > 0 and I % t == 0]
        ti = cands[0] if cands else I

    # Pad rows to a multiple of tm (padded rows are zeros -> contribute zeros,
    # sliced off at the end), instead of asserting divisibility.
    M_pad = _round_up(M, tm)
    if M_pad != M:
        x = jnp.pad(x, ((0, M_pad - M), (0, 0)))

    # bf16 matmul operands, f32 accumulation on the MXU.
    xb = x.astype(jnp.bfloat16)
    wg = w_gate.astype(jnp.bfloat16)
    wu = w_up.astype(jnp.bfloat16)
    wd = w_down.astype(jnp.bfloat16)

    grid = (M_pad // tm, I // ti)

    # VMEM budget (double-buffered tiles + f32 accumulator) with headroom,
    # capped below v7x's 64 MiB physical VMEM.
    bytes_needed = (
        2 * tm * H * 2          # x tile, double-buffered, bf16
        + 2 * 2 * H * ti * 2    # gate + up weight tiles, double-buffered
        + 2 * ti * H * 2        # down weight tile, double-buffered
        + 2 * tm * H * jnp.dtype(out_dtype).itemsize  # output tile
        + tm * H * 4            # f32 accumulator scratch
    )
    vmem_limit = int(min(max(2 * bytes_needed, 16 << 20), 48 << 20))

    cost = pl.CostEstimate(
        flops=6 * M_pad * H * I,
        transcendentals=M_pad * I,
        bytes_accessed=(M_pad * H * 2            # x (bf16)
                        + 3 * H * I * 2          # weights (bf16)
                        + M_pad * H * jnp.dtype(out_dtype).itemsize),
    )

    out = pl.pallas_call(
        _gemma_mlp_kernel,
        out_shape=jax.ShapeDtypeStruct((M_pad, H), out_dtype),
        grid_spec=pltpu.PrefetchScalarGridSpec(
            num_scalar_prefetch=0,
            grid=grid,
            in_specs=[
                pl.BlockSpec((tm, H), lambda i, k: (i, 0)),   # x row tile (resident over k)
                pl.BlockSpec((H, ti), lambda i, k: (0, k)),   # gate weight ti-slice
                pl.BlockSpec((H, ti), lambda i, k: (0, k)),   # up weight ti-slice
                pl.BlockSpec((ti, H), lambda i, k: (k, 0)),   # down weight ti-slice
            ],
            out_specs=pl.BlockSpec((tm, H), lambda i, k: (i, 0)),
            scratch_shapes=[pltpu.VMEM((tm, H), jnp.float32)],
        ),
        compiler_params=pltpu.CompilerParams(
            dimension_semantics=("parallel", "arbitrary"),
            vmem_limit_bytes=vmem_limit,
        ),
        cost_estimate=cost,
    )(xb, wg, wu, wd)

    return out[:M]


def gemma_mlp_ref(x, w_gate, w_up, w_down):
    """Reference mirroring the kernel's dtype pipeline (bf16 matmuls, f32 acc)."""
    xb = x.astype(jnp.bfloat16)
    wg = w_gate.astype(jnp.bfloat16)
    wu = w_up.astype(jnp.bfloat16)
    wd = w_down.astype(jnp.bfloat16)
    gate = _gelu_tanh(jnp.dot(xb, wg, preferred_element_type=jnp.float32))
    up = jnp.dot(xb, wu, preferred_element_type=jnp.float32)
    fuse = (gate * up).astype(jnp.bfloat16)
    return jnp.dot(fuse, wd, preferred_element_type=jnp.float32).astype(x.dtype)


if __name__ == "__main__":
    # Small config consistent with the module: hidden_size=128, intermediate_size=256.
    batch, seq = 2, 8
    hidden_size, intermediate_size = 128, 256

    key = jax.random.PRNGKey(0)
    kx, kg, ku, kd = jax.random.split(key, 4)

    # nn.Linear weights are [out, in]; we store them pre-transposed to [in, out].
    x_bsd = jax.random.normal(kx, (batch, seq, hidden_size), dtype=jnp.float32)
    w_gate = jax.random.normal(kg, (hidden_size, intermediate_size), dtype=jnp.float32) * 0.02
    w_up = jax.random.normal(ku, (hidden_size, intermediate_size), dtype=jnp.float32) * 0.02
    w_down = jax.random.normal(kd, (intermediate_size, hidden_size), dtype=jnp.float32) * 0.02

    x = x_bsd.reshape(batch * seq, hidden_size)  # [M, H], M = batch*seq

    out = gemma_mlp(x, w_gate, w_up, w_down)
    out = jax.block_until_ready(out)

    ref = gemma_mlp_ref(x, w_gate, w_up, w_down)
    assert out.shape == (batch * seq, hidden_size)
    assert jnp.allclose(out, ref, atol=1e-2, rtol=1e-2), "mismatch vs reference"

    # Reshape back to [batch, seq, hidden] like the PyTorch module's output.
    out_bsd = out.reshape(batch, seq, hidden_size)
    jax.block_until_ready(out_bsd)

    print("KERNEL_OK")
</pallas_src>

<mosaic_0001>
module attributes {stable_mosaic.version = 11 : i64} {
  func.func @_gemma_mlp_kernel(%arg0: i32, %arg1: i32, %arg2: memref<128x128xbf16, #tpu.memory_space<vmem>>, %arg3: memref<128x256xbf16, #tpu.memory_space<vmem>>, %arg4: memref<128x256xbf16, #tpu.memory_space<vmem>>, %arg5: memref<256x128xbf16, #tpu.memory_space<vmem>>, %arg6: memref<128x128xf32, #tpu.memory_space<vmem>>, %arg7: memref<128x128xf32, #tpu.memory_space<vmem>>) attributes {dimension_semantics = [#tpu.dimension_semantics<parallel>, #tpu.dimension_semantics<arbitrary>], iteration_bounds = array<i64: 1, 1>, scalar_prefetch = 0 : i64, scratch_operands = 1 : i64, tpu.core_type = #tpu.core_type<tc>, window_params = [{transform_indices = @transform_0, window_bounds = array<i64: 128, 128>}, {transform_indices = @transform_1, window_bounds = array<i64: 128, 256>}, {transform_indices = @transform_2, window_bounds = array<i64: 128, 256>}, {transform_indices = @transform_3, window_bounds = array<i64: 256, 128>}, {transform_indices = @transform_4, window_bounds = array<i64: 128, 128>}]} {
    %c0_i32 = arith.constant 0 : i32
    %0 = arith.cmpi eq, %arg1, %c0_i32 : i32
    %1 = arith.extui %0 : i1 to i32
    %c0_i32_0 = arith.constant 0 : i32
    %2 = arith.cmpi ne, %1, %c0_i32_0 : i32
    scf.if %2 {
      %cst_20 = arith.constant 0.000000e+00 : f32
      %31 = vector.broadcast %cst_20 : f32 to vector<128x128xf32>
      %c0_21 = arith.constant 0 : index
      %c0_22 = arith.constant 0 : index
      %32 = vector.load %arg7[%c0_21, %c0_22] : memref<128x128xf32, #tpu.memory_space<vmem>>, vector<128x128xf32>
      tpu.vector_store %arg7[%c0_21, %c0_22], %31 {strides = array<i32>} : memref<128x128xf32, #tpu.memory_space<vmem>>, vector<128x128xf32>,
    } else {
    }
    %c0 = arith.constant 0 : index
    %c0_1 = arith.constant 0 : index
    %3 = vector.load %arg2[%c0, %c0_1] : memref<128x128xbf16, #tpu.memory_space<vmem>>, vector<128x128xbf16>
    %c0_2 = arith.constant 0 : index
    %c0_3 = arith.constant 0 : index
    %4 = vector.load %arg3[%c0_2, %c0_3] : memref<128x256xbf16, #tpu.memory_space<vmem>>, vector<128x256xbf16>
    %cst = arith.constant dense<0.000000e+00> : vector<128x256xf32>
    %5 = tpu.matmul %3, %4, %cst {dimension_numbers = #tpu.dot_dimension_numbers<[1], [0], [0], [1], [0, 0, 1, 1], [], []>} : vector<128x128xbf16>, vector<128x256xbf16>, vector<128x256xf32> -> vector<128x256xf32>
    %cst_4 = arith.constant 5.000000e-01 : f32
    %6 = vector.broadcast %cst_4 : f32 to vector<128x256xf32>
    %7 = arith.mulf %6, %5 : vector<128x256xf32>
    %cst_5 = arith.constant 4.471500e-02 : f32
    %8 = vector.broadcast %cst_5 : f32 to vector<128x256xf32>
    %9 = arith.mulf %8, %5 : vector<128x256xf32>
    %10 = arith.mulf %9, %5 : vector<128x256xf32>
    %11 = arith.mulf %10, %5 : vector<128x256xf32>
    %12 = arith.addf %5, %11 : vector<128x256xf32>
    %cst_6 = arith.constant 0.797884583 : f32
    %13 = vector.broadcast %cst_6 : f32 to vector<128x256xf32>
    %14 = arith.mulf %13, %12 : vector<128x256xf32>
    %15 = math.tanh %14 : vector<128x256xf32>
    %cst_7 = arith.constant 1.000000e+00 : f32
    %16 = vector.broadcast %cst_7 : f32 to vector<128x256xf32>
    %17 = arith.addf %16, %15 : vector<128x256xf32>
    %18 = arith.mulf %7, %17 : vector<128x256xf32>
    %c0_8 = arith.constant 0 : index
    %c0_9 = arith.constant 0 : index
    %19 = vector.load %arg4[%c0_8, %c0_9] : memref<128x256xbf16, #tpu.memory_space<vmem>>, vector<128x256xbf16>
    %cst_10 = arith.constant dense<0.000000e+00> : vector<128x256xf32>
    %20 = tpu.matmul %3, %19, %cst_10 {dimension_numbers = #tpu.dot_dimension_numbers<[1], [0], [0], [1], [0, 0, 1, 1], [], []>} : vector<128x128xbf16>, vector<128x256xbf16>, vector<128x256xf32> -> vector<128x256xf32>
    %21 = arith.mulf %18, %20 : vector<128x256xf32>
    %22 = arith.truncf %21 : vector<128x256xf32> to vector<128x256xbf16>
    %c0_11 = arith.constant 0 : index
    %c0_12 = arith.constant 0 : index
    %23 = vector.load %arg7[%c0_11, %c0_12] : memref<128x128xf32, #tpu.memory_space<vmem>>, vector<128x128xf32>
    %c0_13 = arith.constant 0 : index
    %c0_14 = arith.constant 0 : index
    %24 = vector.load %arg5[%c0_13, %c0_14] : memref<256x128xbf16, #tpu.memory_space<vmem>>, vector<256x128xbf16>
    %cst_15 = arith.constant dense<0.000000e+00> : vector<128x128xf32>
    %25 = tpu.matmul %22, %24, %cst_15 {dimension_numbers = #tpu.dot_dimension_numbers<[1], [0], [0], [1], [0, 0, 1, 1], [], []>} : vector<128x256xbf16>, vector<256x128xbf16>, vector<128x128xf32> -> vector<128x128xf32>
    %26 = arith.addf %23, %25 : vector<128x128xf32>
    %c0_16 = arith.constant 0 : index
    %c0_17 = arith.constant 0 : index
    %27 = vector.load %arg7[%c0_16, %c0_17] : memref<128x128xf32, #tpu.memory_space<vmem>>, vector<128x128xf32>
    tpu.vector_store %arg7[%c0_16, %c0_17], %26 {strides = array<i32>} : memref<128x128xf32, #tpu.memory_space<vmem>>, vector<128x128xf32>,
    %c0_i32_18 = arith.constant 0 : i32
    %28 = arith.cmpi eq, %arg1, %c0_i32_18 : i32
    %29 = arith.extui %28 : i1 to i32
    %c0_i32_19 = arith.constant 0 : i32
    %30 = arith.cmpi ne, %29, %c0_i32_19 : i32
    scf.if %30 {
      %c0_20 = arith.constant 0 : index
      %c0_21 = arith.constant 0 : index
      %31 = vector.load %arg7[%c0_20, %c0_21] : memref<128x128xf32, #tpu.memory_space<vmem>>, vector<128x128xf32>
      %c0_22 = arith.constant 0 : index
      %c0_23 = arith.constant 0 : index
      %32 = vector.load %arg6[%c0_22, %c0_23] : memref<128x128xf32, #tpu.memory_space<vmem>>, vector<128x128xf32>
      tpu.vector_store %arg6[%c0_22, %c0_23], %31 {strides = array<i32>} : memref<128x128xf32, #tpu.memory_space<vmem>>, vector<128x128xf32>,
    } else {
    }
    return
  }
  func.func @transform_0(%arg0: i32, %arg1: i32) -> (i32, i32) {
    %c0_i32 = arith.constant 0 : i32
    %c0_i32_0 = arith.constant 0 : i32
    return %arg0, %c0_i32 : i32, i32
  }
  func.func @transform_1(%arg0: i32, %arg1: i32) -> (i32, i32) {
    %c0_i32 = arith.constant 0 : i32
    %c0_i32_0 = arith.constant 0 : i32
    return %c0_i32, %arg1 : i32, i32
  }
  func.func @transform_2(%arg0: i32, %arg1: i32) -> (i32, i32) {
    %c0_i32 = arith.constant 0 : i32
    %c0_i32_0 = arith.constant 0 : i32
    return %c0_i32, %arg1 : i32, i32
  }
  func.func @transform_3(%arg0: i32, %arg1: i32) -> (i32, i32) {
    %c0_i32 = arith.constant 0 : i32
    %c0_i32_0 = arith.constant 0 : i32
    return %arg1, %c0_i32 : i32, i32
  }
  func.func @transform_4(%arg0: i32, %arg1: i32) -> (i32, i32) {
    %c0_i32 = arith.constant 0 : i32
    %c0_i32_0 = arith.constant 0 : i32
    return %arg0, %c0_i32 : i32, i32
  }
}

</mosaic_0001>

<llo_original>
// kernel: tpu_custom_call.1
$region0: #{tpu_custom_call.1}
  #allocation0 [shape = 'u32[]', space=smem, size = 0x4, offset = 0x4, fixed_abs, tag = 'smem constant byte address 0x4 - core index']
  #allocation1 [shape = 'u32[144,128]{1,0:T(1,128)}', space=vmem, size = 0x12000, scoped, tag = 'internal scratch']
  #allocation2 [shape = 'f32[128,128]{1,0:T(8,128)}', space=vmem, size = 0x10000, scoped, tag = 'scratch operand']
  %s0 = inlined_call_operand.hbm [shape: bf16[128,128], index: 0, kind: input, shape index: {}]
  %s1 = inlined_call_operand.hbm [shape: bf16[128,256], index: 1, kind: input, shape index: {}]
  %s2 = inlined_call_operand.hbm [shape: bf16[128,256], index: 2, kind: input, shape index: {}]
  %s3 = inlined_call_operand.hbm [shape: bf16[256,128], index: 3, kind: input, shape index: {}]
  %s4 = inlined_call_operand.hbm [shape: f32[128,128], index: 4, kind: output, shape index: {}]
  %s5 = sld [smem:[#allocation0]]
  $region50: #{tpu_custom_call.1} parent=0
    _
  %s7 = ssub.s32 1, %s5
  %s8 = scalar_select 0, %s7, %s5
  $region1: #{tpu_custom_call.1} parent=0
    #allocation3 [shape = 'u8[32768]{0}', space=vmem, size = 0x8000, scoped, tag = 'input window, operand 0, single buffered']
    #allocation4 [shape = 's32[1]{0}', space=sflag, size = 0x4, scoped, tag = 'scoped memory for tpu_custom_call.1']
    #allocation5 [shape = 's32[1]{0}', space=sflag, size = 0x4, scoped, tag = 'scoped memory for tpu_custom_call.1']
    #allocation6 [shape = 'u8[65536]{0}', space=vmem, size = 0x10000, scoped, tag = 'input window, operand 1, single buffered']
    #allocation7 [shape = 's32[1]{0}', space=sflag, size = 0x4, scoped, tag = 'scoped memory for tpu_custom_call.1']
    #allocation8 [shape = 'u8[65536]{0}', space=vmem, size = 0x10000, scoped, tag = 'input window, operand 2, single buffered']
    #allocation9 [shape = 'u8[65536]{0}', space=vmem, size = 0x10000, scoped, tag = 'input window, operand 3, single buffered']
    #allocation10 [shape = 's32[1]{0}', space=sflag, size = 0x4, scoped, tag = 'scoped memory for tpu_custom_call.1']
    #allocation11 [shape = 'u8[65536]{0}', space=vmem, size = 0x10000, scoped, tag = 'output window, operand 0, single buffered']
    %9 = vsyncpa [#allocation4], 0
    %10 = vsyncpa [#allocation7], 0
    %11 = vsyncpa [#allocation10], 0
    %12 = vsyncpa [#allocation5], 0
    // Predicated region
    $region2: #{tpu_custom_call.1} parent=1 // pred_check
      _
    $region3: #{tpu_custom_call.1} parent=1 // pred_check_branch
      %14 = sbr.rel (0) target = $region5
    $region4: #{tpu_custom_call.1} parent=1 // pred_region
      %s16 = ssub.s32 1024, 1024
      %17 = vsyncadd [#allocation4], %s16
      %s18 = sshll.u32 [#allocation3], 4
      %s19 = int_to_ptr.vmem [resolvable:$true] %s18
      %24 = dma.hbm_to_vmem [thread:$0]  %s0, 1024, %s19, [#allocation4], 64, 64, 4
    $region5: #{tpu_custom_call.1} parent=1 // pred_fallthru
      _
    // Predicated region
    $region6: #{tpu_custom_call.1} parent=1 // pred_check
      _
    $region7: #{tpu_custom_call.1} parent=1 // pred_check_branch
      %26 = sbr.rel (0) target = $region9
    $region8: #{tpu_custom_call.1} parent=1 // pred_region
      %s28 = ssub.s32 2048, 2048
      %29 = vsyncadd [#allocation7], %s28
      %s30 = sshll.u32 [#allocation6], 4
      %s31 = int_to_ptr.vmem [resolvable:$true] %s30
      %36 = dma.hbm_to_vmem [thread:$0]  %s1, 2048, %s31, [#allocation7], 128, 128, 8
    $region9: #{tpu_custom_call.1} parent=1 // pred_fallthru
      _
    // Predicated region
    $region10: #{tpu_custom_call.1} parent=1 // pred_check
      _
    $region11: #{tpu_custom_call.1} parent=1 // pred_check_branch
      %38 = sbr.rel (0) target = $region13
    $region12: #{tpu_custom_call.1} parent=1 // pred_region
      %s40 = ssub.s32 2048, 2048
      %41 = vsyncadd [#allocation7], %s40
      %s42 = sshll.u32 [#allocation8], 4
      %s43 = int_to_ptr.vmem [resolvable:$true] %s42
      %48 = dma.hbm_to_vmem [thread:$0]  %s2, 2048, %s43, [#allocation7], 128, 128, 8
    $region13: #{tpu_custom_call.1} parent=1 // pred_fallthru
      _
    // Predicated region
    $region14: #{tpu_custom_call.1} parent=1 // pred_check
      _
    $region15: #{tpu_custom_call.1} parent=1 // pred_check_branch
      %50 = sbr.rel (0) target = $region17
    $region16: #{tpu_custom_call.1} parent=1 // pred_region
      %s52 = ssub.s32 2048, 2048
      %53 = vsyncadd [#allocation10], %s52
      %s54 = sshll.u32 [#allocation9], 4
      %s55 = int_to_ptr.vmem [resolvable:$true] %s54
      %60 = dma.hbm_to_vmem [thread:$0]  %s3, 2048, %s55, [#allocation10], 64, 64, 4
    $region17: #{tpu_custom_call.1} parent=1 // pred_fallthru
      _
    // Predicated region
    $region18: #{tpu_custom_call.1} parent=1 // pred_check
      _
    $region19: #{tpu_custom_call.1} parent=1 // pred_check_branch
      %62 = sbr.rel (0) target = $region21
    $region20: #{tpu_custom_call.1} parent=1 // pred_region
      %63 = dma.done [#allocation4], 1024
    $region21: #{tpu_custom_call.1} parent=1 // pred_fallthru
      _
    // Predicated region
    $region22: #{tpu_custom_call.1} parent=1 // pred_check
      _
    $region23: #{tpu_custom_call.1} parent=1 // pred_check_branch
      %65 = sbr.rel (0) target = $region25
    $region24: #{tpu_custom_call.1} parent=1 // pred_region
      %66 = dma.done [#allocation7], 2048
    $region25: #{tpu_custom_call.1} parent=1 // pred_fallthru
      _
    // Predicated region
    $region26: #{tpu_custom_call.1} parent=1 // pred_check
      _
    $region27: #{tpu_custom_call.1} parent=1 // pred_check_branch
      %68 = sbr.rel (0) target = $region29
    $region28: #{tpu_custom_call.1} parent=1 // pred_region
      %69 = dma.done [#allocation7], 2048
    $region29: #{tpu_custom_call.1} parent=1 // pred_fallthru
      _
    // Predicated region
    $region30: #{tpu_custom_call.1} parent=1 // pred_check
      _
    $region31: #{tpu_custom_call.1} parent=1 // pred_check_branch
      %71 = sbr.rel (0) target = $region33
    $region32: #{tpu_custom_call.1} parent=1 // pred_region
      %72 = dma.done [#allocation10], 2048
    $region33: #{tpu_custom_call.1} parent=1 // pred_fallthru
      _
    %p74 = scmp.eq.s32.totalorder 0, 0
    // Predicated region
    $region34: #{tpu_custom_call.1} parent=1 // pred_check
      %p75 = pneg %p74
    $region35: #{tpu_custom_call.1} parent=1 // pred_check_branch
      %77 = sbr.rel (%p75) target = $region37
    $region36: #{tpu_custom_call.1} parent=1 // pred_region
      %78 = vst [vmem:[#allocation2] sm:$0xff] 0.0
      %79 = vst [vmem:[#allocation2 + $0x8] sm:$0xff] 0.0
      %80 = vst [vmem:[#allocation2 + $0x10] sm:$0xff] 0.0
      %81 = vst [vmem:[#allocation2 + $0x18] sm:$0xff] 0.0
      %82 = vst [vmem:[#allocation2 + $0x20] sm:$0xff] 0.0
      %83 = vst [vmem:[#allocation2 + $0x28] sm:$0xff] 0.0
      %84 = vst [vmem:[#allocation2 + $0x30] sm:$0xff] 0.0
      %85 = vst [vmem:[#allocation2 + $0x38] sm:$0xff] 0.0
      %86 = vst [vmem:[#allocation2 + $0x40] sm:$0xff] 0.0
      %87 = vst [vmem:[#allocation2 + $0x48] sm:$0xff] 0.0
      %88 = vst [vmem:[#allocation2 + $0x50] sm:$0xff] 0.0
      %89 = vst [vmem:[#allocation2 + $0x58] sm:$0xff] 0.0
      %90 = vst [vmem:[#allocation2 + $0x60] sm:$0xff] 0.0
      %91 = vst [vmem:[#allocation2 + $0x68] sm:$0xff] 0.0
      %92 = vst [vmem:[#allocation2 + $0x70] sm:$0xff] 0.0
      %93 = vst [vmem:[#allocation2 + $0x78] sm:$0xff] 0.0
    $region37: #{tpu_custom_call.1} parent=1 // pred_fallthru
      _
    %v94 = vld [vmem:[#allocation3] sm:$0xf]
    %v95 = vld [vmem:[#allocation3 + $0x4] sm:$0xf]
    %v96 = vld [vmem:[#allocation3 + $0x8] sm:$0xf]
    %v97 = vld [vmem:[#allocation3 + $0xc] sm:$0xf]
    %v98 = vld [vmem:[#allocation3 + $0x10] sm:$0xf]
    %v99 = vld [vmem:[#allocation3 + $0x14] sm:$0xf]
    %v100 = vld [vmem:[#allocation3 + $0x18] sm:$0xf]
    %v101 = vld [vmem:[#allocation3 + $0x1c] sm:$0xf]
    %v102 = vld [vmem:[#allocation3 + $0x20] sm:$0xf]
    %v103 = vld [vmem:[#allocation3 + $0x24] sm:$0xf]
    %v104 = vld [vmem:[#allocation3 + $0x28] sm:$0xf]
    %v105 = vld [vmem:[#allocation3 + $0x2c] sm:$0xf]
    %v106 = vld [vmem:[#allocation3 + $0x30] sm:$0xf]
    %v107 = vld [vmem:[#allocation3 + $0x34] sm:$0xf]
    %v108 = vld [vmem:[#allocation3 + $0x38] sm:$0xf]
    %v109 = vld [vmem:[#allocation3 + $0x3c] sm:$0xf]
    %v110 = vld [vmem:[#allocation6] sm:$0xff]
    %v111 = vld [vmem:[#allocation6 + $0x8] sm:$0xff]
    %v112 = vld [vmem:[#allocation6 + $0x10] sm:$0xff]
    %v113 = vld [vmem:[#allocation6 + $0x18] sm:$0xff]
    %v114 = vld [vmem:[#allocation6 + $0x20] sm:$0xff]
    %v115 = vld [vmem:[#allocation6 + $0x28] sm:$0xff]
    %v116 = vld [vmem:[#allocation6 + $0x30] sm:$0xff]
    %v117 = vld [vmem:[#allocation6 + $0x38] sm:$0xff]
    %v118 = vld [vmem:[#allocation6 + $0x40] sm:$0xff]
    %v119 = vld [vmem:[#allocation6 + $0x48] sm:$0xff]
    %v120 = vld [vmem:[#allocation6 + $0x50] sm:$0xff]
    %v121 = vld [vmem:[#allocation6 + $0x58] sm:$0xff]
    %v122 = vld [vmem:[#allocation6 + $0x60] sm:$0xff]
    %v123 = vld [vmem:[#allocation6 + $0x68] sm:$0xff]
    %v124 = vld [vmem:[#allocation6 + $0x70] sm:$0xff]
    %v125 = vld [vmem:[#allocation6 + $0x78] sm:$0xff]
    %v142 = vunpack.c.l.b16 %v94
    %v143 = vunpack.c.l.b16 %v95
    %v144 = vunpack.c.l.b16 %v96
    %v145 = vunpack.c.l.b16 %v97
    %v146 = vunpack.c.l.b16 %v98
    %v147 = vunpack.c.l.b16 %v99
    %v148 = vunpack.c.l.b16 %v100
    %v149 = vunpack.c.l.b16 %v101
    %v150 = vunpack.c.l.b16 %v102
    %v151 = vunpack.c.l.b16 %v103
    %v152 = vunpack.c.l.b16 %v104
    %v153 = vunpack.c.l.b16 %v105
    %v154 = vunpack.c.l.b16 %v106
    %v155 = vunpack.c.l.b16 %v107
    %v156 = vunpack.c.l.b16 %v108
    %v157 = vunpack.c.l.b16 %v109
    %v158 = vpack.c.b16 %v143, %v142
    %v159 = vpack.c.b16 %v145, %v144
    %v160 = vpack.c.b16 %v147, %v146
    %v161 = vpack.c.b16 %v149, %v148
    %v162 = vpack.c.b16 %v151, %v150
    %v163 = vpack.c.b16 %v153, %v152
    %v164 = vpack.c.b16 %v155, %v154
    %v165 = vpack.c.b16 %v157, %v156
    %v190 = vunpack.c.l.b16 %v110
    %v191 = vunpack.c.h.b16 %v110
    %v192 = vunpack.c.l.b16 %v111
    %v193 = vunpack.c.h.b16 %v111
    %v194 = vunpack.c.l.b16 %v112
    %v195 = vunpack.c.h.b16 %v112
    %v196 = vunpack.c.l.b16 %v113
    %v197 = vunpack.c.h.b16 %v113
    %v198 = vunpack.c.l.b16 %v114
    %v199 = vunpack.c.h.b16 %v114
    %v200 = vunpack.c.l.b16 %v115
    %v201 = vunpack.c.h.b16 %v115
    %v202 = vunpack.c.l.b16 %v116
    %v203 = vunpack.c.h.b16 %v116
    %v204 = vunpack.c.l.b16 %v117
    %v205 = vunpack.c.h.b16 %v117
    %v206 = vunpack.c.l.b16 %v118
    %v207 = vunpack.c.h.b16 %v118
    %v208 = vunpack.c.l.b16 %v119
    %v209 = vunpack.c.h.b16 %v119
    %v210 = vunpack.c.l.b16 %v120
    %v211 = vunpack.c.h.b16 %v120
    %v212 = vunpack.c.l.b16 %v121
    %v213 = vunpack.c.h.b16 %v121
    %v214 = vunpack.c.l.b16 %v122
    %v215 = vunpack.c.h.b16 %v122
    %v216 = vunpack.c.l.b16 %v123
    %v217 = vunpack.c.h.b16 %v123
    %v218 = vunpack.c.l.b16 %v124
    %v219 = vunpack.c.h.b16 %v124
    %v220 = vunpack.c.l.b16 %v125
    %v221 = vunpack.c.h.b16 %v125
    %v222 = vpack.c.b16 %v192, %v190
    %v223 = vpack.c.b16 %v193, %v191
    %v224 = vpack.c.b16 %v196, %v194
    %v225 = vpack.c.b16 %v197, %v195
    %v226 = vpack.c.b16 %v200, %v198
    %v227 = vpack.c.b16 %v201, %v199
    %v228 = vpack.c.b16 %v204, %v202
    %v229 = vpack.c.b16 %v205, %v203
    %v230 = vpack.c.b16 %v208, %v206
    %v231 = vpack.c.b16 %v209, %v207
    %v232 = vpack.c.b16 %v212, %v210
    %v233 = vpack.c.b16 %v213, %v211
    %v234 = vpack.c.b16 %v216, %v214
    %v235 = vpack.c.b16 %v217, %v215
    %v236 = vpack.c.b16 %v220, %v218
    %v237 = vpack.c.b16 %v221, %v219
    %254 = vmatprep.subr.bf16.mxu0 %v223
    %255 = vmatpush1.bf16.msra.mxu0 %v222
    %256 = vmatprep.subr.bf16.mxu0 %v225
    %257 = vmatpush1.bf16.msra.mxu0 %v224
    %258 = vmatprep.subr.bf16.mxu0 %v227
    %259 = vmatpush1.bf16.msra.mxu0 %v226
    %260 = vmatprep.subr.bf16.mxu0 %v229
    %261 = vmatpush1.bf16.msra.mxu0 %v228
    %262 = vmatprep.subr.bf16.mxu0 %v231
    %263 = vmatpush1.bf16.msra.mxu0 %v230
    %264 = vmatprep.subr.bf16.mxu0 %v233
    %265 = vmatpush1.bf16.msra.mxu0 %v232
    %266 = vmatprep.subr.bf16.mxu0 %v235
    %267 = vmatpush1.bf16.msra.mxu0 %v234
    %268 = vmatprep.subr.bf16.mxu0 %v237
    %269 = vmatpush1.bf16.msra.mxu0 %v236
    %270 = vmatprep.subr.bf16.mxu0 0
    %271 = vmatpush1.bf16.msra.mxu0 0
    %272 = vmatprep.subr.bf16.mxu0 0
    %273 = vmatpush1.bf16.msra.mxu0 0
    %274 = vmatprep.subr.bf16.mxu0 0
    %275 = vmatpush1.bf16.msra.mxu0 0
    %276 = vmatprep.subr.bf16.mxu0 0
    %277 = vmatpush1.bf16.msra.mxu0 0
    %278 = vmatprep.subr.bf16.mxu0 0
    %279 = vmatpush1.bf16.msra.mxu0 0
    %280 = vmatprep.subr.bf16.mxu0 0
    %281 = vmatpush1.bf16.msra.mxu0 0
    %282 = vmatprep.subr.bf16.mxu0 0
    %283 = vmatpush1.bf16.msra.mxu0 0
    %284 = vmatprep.subr.bf16.mxu0 0
    %285 = vmatpush1.bf16.msra.mxu0 0
    %286 = vmatprep.mubr.bf16.mxu0 0
    %287 = vmatmul.mubr.bf16.gmra.mrb[0].mxu0 %v158
    %v288 = vpop.f32.mrb[0].mxu0
    %v289 = vadd.f32 0.0, %v288
    %v290 = vpop.f32.mrb[0].mxu0
    %v291 = vadd.f32 0.0, %v290
    %v292 = vpop.f32.mrb[0].mxu0
    %v293 = vadd.f32 0.0, %v292
    %v294 = vpop.f32.mrb[0].mxu0
    %v295 = vadd.f32 0.0, %v294
    %296 = vmatprep.mubr.bf16.mxu0 0
    %297 = vmatmul.mubr.bf16.gmra.mrb[0].mxu0 %v159
    %v298 = vpop.f32.mrb[0].mxu0
    %v299 = vadd.f32 0.0, %v298
    %v300 = vpop.f32.mrb[0].mxu0
    %v301 = vadd.f32 0.0, %v300
    %v302 = vpop.f32.mrb[0].mxu0
    %v303 = vadd.f32 0.0, %v302
    %v304 = vpop.f32.mrb[0].mxu0
    %v305 = vadd.f32 0.0, %v304
    %306 = vmatprep.mubr.bf16.mxu0 0
    %307 = vmatmul.mubr.bf16.gmra.mrb[0].mxu0 %v160
    %v308 = vpop.f32.mrb[0].mxu0
    %v309 = vadd.f32 0.0, %v308
    %v310 = vpop.f32.mrb[0].mxu0
    %v311 = vadd.f32 0.0, %v310
    %v312 = vpop.f32.mrb[0].mxu0
    %v313 = vadd.f32 0.0, %v312
    %v314 = vpop.f32.mrb[0].mxu0
    %v315 = vadd.f32 0.0, %v314
    %316 = vmatprep.mubr.bf16.mxu0 0
    %317 = vmatmul.mubr.bf16.gmra.mrb[0].mxu0 %v161
    %v318 = vpop.f32.mrb[0].mxu0
    %v319 = vadd.f32 0.0, %v318
    %v320 = vpop.f32.mrb[0].mxu0
    %v321 = vadd.f32 0.0, %v320
    %v322 = vpop.f32.mrb[0].mxu0
    %v323 = vadd.f32 0.0, %v322
    %v324 = vpop.f32.mrb[0].mxu0
    %v325 = vadd.f32 0.0, %v324
    %326 = vmatprep.mubr.bf16.mxu0 0
    %327 = vmatmul.mubr.bf16.gmra.mrb[0].mxu0 %v162
    %v328 = vpop.f32.mrb[0].mxu0
    %v329 = vadd.f32 0.0, %v328
    %v330 = vpop.f32.mrb[0].mxu0
    %v331 = vadd.f32 0.0, %v330
    %v332 = vpop.f32.mrb[0].mxu0
    %v333 = vadd.f32 0.0, %v332
    %v334 = vpop.f32.mrb[0].mxu0
    %v335 = vadd.f32 0.0, %v334
    %336 = vmatprep.mubr.bf16.mxu0 0
    %337 = vmatmul.mubr.bf16.gmra.mrb[0].mxu0 %v163
    %v338 = vpop.f32.mrb[0].mxu0
    %v339 = vadd.f32 0.0, %v338
    %v340 = vpop.f32.mrb[0].mxu0
    %v341 = vadd.f32 0.0, %v340
    %v342 = vpop.f32.mrb[0].mxu0
    %v343 = vadd.f32 0.0, %v342
    %v344 = vpop.f32.mrb[0].mxu0
    %v345 = vadd.f32 0.0, %v344
    %346 = vmatprep.mubr.bf16.mxu0 0
    %347 = vmatmul.mubr.bf16.gmra.mrb[0].mxu0 %v164
    %v348 = vpop.f32.mrb[0].mxu0
    %v349 = vadd.f32 0.0, %v348
    %v350 = vpop.f32.mrb[0].mxu0
    %v351 = vadd.f32 0.0, %v350
    %v352 = vpop.f32.mrb[0].mxu0
    %v353 = vadd.f32 0.0, %v352
    %v354 = vpop.f32.mrb[0].mxu0
    %v355 = vadd.f32 0.0, %v354
    %356 = vmatprep.mubr.bf16.mxu0 0
    %357 = vmatmul.mubr.bf16.gmra.mrb[0].mxu0 %v165
    %v358 = vpop.f32.mrb[0].mxu0
    %v359 = vadd.f32 0.0, %v358
    %v360 = vpop.f32.mrb[0].mxu0
    %v361 = vadd.f32 0.0, %v360
    %v362 = vpop.f32.mrb[0].mxu0
    %v363 = vadd.f32 0.0, %v362
    %v364 = vpop.f32.mrb[0].mxu0
    %v365 = vadd.f32 0.0, %v364
    %366 = vdwg.mxu0
    %v367 = vmul.f32 %v289, 0.5
    %v368 = vmul.f32 %v291, 0.5
    %v369 = vmul.f32 %v293, 0.5
    %v370 = vmul.f32 %v295, 0.5
    %v371 = vmul.f32 %v299, 0.5
    %v372 = vmul.f32 %v301, 0.5
    %v373 = vmul.f32 %v303, 0.5
    %v374 = vmul.f32 %v305, 0.5
    %v375 = vmul.f32 %v309, 0.5
    %v376 = vmul.f32 %v311, 0.5
    %v377 = vmul.f32 %v313, 0.5
    %v378 = vmul.f32 %v315, 0.5
    %v379 = vmul.f32 %v319, 0.5
    %v380 = vmul.f32 %v321, 0.5
    %v381 = vmul.f32 %v323, 0.5
    %v382 = vmul.f32 %v325, 0.5
    %v383 = vmul.f32 %v329, 0.5
    %v384 = vmul.f32 %v331, 0.5
    %v385 = vmul.f32 %v333, 0.5
    %v386 = vmul.f32 %v335, 0.5
    %v387 = vmul.f32 %v339, 0.5
    %v388 = vmul.f32 %v341, 0.5
    %v389 = vmul.f32 %v343, 0.5
    %v390 = vmul.f32 %v345, 0.5
    %v391 = vmul.f32 %v349, 0.5
    %v392 = vmul.f32 %v351, 0.5
    %v393 = vmul.f32 %v353, 0.5
    %v394 = vmul.f32 %v355, 0.5
    %v395 = vmul.f32 %v359, 0.5
    %v396 = vmul.f32 %v361, 0.5
    %v397 = vmul.f32 %v363, 0.5
    %v398 = vmul.f32 %v365, 0.5
    %v399 = vmul.f32 %v289, 0.044715
    %v400 = vmul.f32 %v291, 0.044715
    %v401 = vmul.f32 %v293, 0.044715
    %v402 = vmul.f32 %v295, 0.044715
    %v403 = vmul.f32 %v299, 0.044715
    %v404 = vmul.f32 %v301, 0.044715
    %v405 = vmul.f32 %v303, 0.044715
    %v406 = vmul.f32 %v305, 0.044715
    %v407 = vmul.f32 %v309, 0.044715
    %v408 = vmul.f32 %v311, 0.044715
    %v409 = vmul.f32 %v313, 0.044715
    %v410 = vmul.f32 %v315, 0.044715
    %v411 = vmul.f32 %v319, 0.044715
    %v412 = vmul.f32 %v321, 0.044715
    %v413 = vmul.f32 %v323, 0.044715
    %v414 = vmul.f32 %v325, 0.044715
    %v415 = vmul.f32 %v329, 0.044715
    %v416 = vmul.f32 %v331, 0.044715
    %v417 = vmul.f32 %v333, 0.044715
    %v418 = vmul.f32 %v335, 0.044715
    %v419 = vmul.f32 %v339, 0.044715
    %v420 = vmul.f32 %v341, 0.044715
    %v421 = vmul.f32 %v343, 0.044715
    %v422 = vmul.f32 %v345, 0.044715
    %v423 = vmul.f32 %v349, 0.044715
    %v424 = vmul.f32 %v351, 0.044715
    %v425 = vmul.f32 %v353, 0.044715
    %v426 = vmul.f32 %v355, 0.044715
    %v427 = vmul.f32 %v359, 0.044715
    %v428 = vmul.f32 %v361, 0.044715
    %v429 = vmul.f32 %v363, 0.044715
    %v430 = vmul.f32 %v365, 0.044715
    %v431 = vmul.f32 %v399, %v289
    %v432 = vmul.f32 %v400, %v291
    %v433 = vmul.f32 %v401, %v293
    %v434 = vmul.f32 %v402, %v295
    %v435 = vmul.f32 %v403, %v299
    %v436 = vmul.f32 %v404, %v301
    %v437 = vmul.f32 %v405, %v303
    %v438 = vmul.f32 %v406, %v305
    %v439 = vmul.f32 %v407, %v309
    %v440 = vmul.f32 %v408, %v311
    %v441 = vmul.f32 %v409, %v313
    %v442 = vmul.f32 %v410, %v315
    %v443 = vmul.f32 %v411, %v319
    %v444 = vmul.f32 %v412, %v321
    %v445 = vmul.f32 %v413, %v323
    %v446 = vmul.f32 %v414, %v325
    %v447 = vmul.f32 %v415, %v329
    %v448 = vmul.f32 %v416, %v331
    %v449 = vmul.f32 %v417, %v333
    %v450 = vmul.f32 %v418, %v335
    %v451 = vmul.f32 %v419, %v339
    %v452 = vmul.f32 %v420, %v341
    %v453 = vmul.f32 %v421, %v343
    %v454 = vmul.f32 %v422, %v345
    %v455 = vmul.f32 %v423, %v349
    %v456 = vmul.f32 %v424, %v351
    %v457 = vmul.f32 %v425, %v353
    %v458 = vmul.f32 %v426, %v355
    %v459 = vmul.f32 %v427, %v359
    %v460 = vmul.f32 %v428, %v361
    %v461 = vmul.f32 %v429, %v363
    %v462 = vmul.f32 %v430, %v365
    %v463 = vmul.f32 %v431, %v289
    %v464 = vmul.f32 %v432, %v291
    %v465 = vmul.f32 %v433, %v293
    %v466 = vmul.f32 %v434, %v295
    %v467 = vmul.f32 %v435, %v299
    %v468 = vmul.f32 %v436, %v301
    %v469 = vmul.f32 %v437, %v303
    %v470 = vmul.f32 %v438, %v305
    %v471 = vmul.f32 %v439, %v309
    %v472 = vmul.f32 %v440, %v311
    %v473 = vmul.f32 %v441, %v313
    %v474 = vmul.f32 %v442, %v315
    %v475 = vmul.f32 %v443, %v319
    %v476 = vmul.f32 %v444, %v321
    %v477 = vmul.f32 %v445, %v323
    %v478 = vmul.f32 %v446, %v325
    %v479 = vmul.f32 %v447, %v329
    %v480 = vmul.f32 %v448, %v331
    %v481 = vmul.f32 %v449, %v333
    %v482 = vmul.f32 %v450, %v335
    %v483 = vmul.f32 %v451, %v339
    %v484 = vmul.f32 %v452, %v341
    %v485 = vmul.f32 %v453, %v343
    %v486 = vmul.f32 %v454, %v345
    %v487 = vmul.f32 %v455, %v349
    %v488 = vmul.f32 %v456, %v351
    %v489 = vmul.f32 %v457, %v353
    %v490 = vmul.f32 %v458, %v355
    %v491 = vmul.f32 %v459, %v359
    %v492 = vmul.f32 %v460, %v361
    %v493 = vmul.f32 %v461, %v363
    %v494 = vmul.f32 %v462, %v365
    %v495 = vadd.f32 %v289, %v463
    %v496 = vadd.f32 %v291, %v464
    %v497 = vadd.f32 %v293, %v465
    %v498 = vadd.f32 %v295, %v466
    %v499 = vadd.f32 %v299, %v467
    %v500 = vadd.f32 %v301, %v468
    %v501 = vadd.f32 %v303, %v469
    %v502 = vadd.f32 %v305, %v470
    %v503 = vadd.f32 %v309, %v471
    %v504 = vadd.f32 %v311, %v472
    %v505 = vadd.f32 %v313, %v473
    %v506 = vadd.f32 %v315, %v474
    %v507 = vadd.f32 %v319, %v475
    %v508 = vadd.f32 %v321, %v476
    %v509 = vadd.f32 %v323, %v477
    %v510 = vadd.f32 %v325, %v478
    %v511 = vadd.f32 %v329, %v479
    %v512 = vadd.f32 %v331, %v480
    %v513 = vadd.f32 %v333, %v481
    %v514 = vadd.f32 %v335, %v482
    %v515 = vadd.f32 %v339, %v483
    %v516 = vadd.f32 %v341, %v484
    %v517 = vadd.f32 %v343, %v485
    %v518 = vadd.f32 %v345, %v486
    %v519 = vadd.f32 %v349, %v487
    %v520 = vadd.f32 %v351, %v488
    %v521 = vadd.f32 %v353, %v489
    %v522 = vadd.f32 %v355, %v490
    %v523 = vadd.f32 %v359, %v491
    %v524 = vadd.f32 %v361, %v492
    %v525 = vadd.f32 %v363, %v493
    %v526 = vadd.f32 %v365, %v494
    %v527 = vmul.f32 %v495, 0.7978846
    %v528 = vmul.f32 %v496, 0.7978846
    %v529 = vmul.f32 %v497, 0.7978846
    %v530 = vmul.f32 %v498, 0.7978846
    %v531 = vmul.f32 %v499, 0.7978846
    %v532 = vmul.f32 %v500, 0.7978846
    %v533 = vmul.f32 %v501, 0.7978846
    %v534 = vmul.f32 %v502, 0.7978846
    %v535 = vmul.f32 %v503, 0.7978846
    %v536 = vmul.f32 %v504, 0.7978846
    %v537 = vmul.f32 %v505, 0.7978846
    %v538 = vmul.f32 %v506, 0.7978846
    %v539 = vmul.f32 %v507, 0.7978846
    %v540 = vmul.f32 %v508, 0.7978846
    %v541 = vmul.f32 %v509, 0.7978846
    %v542 = vmul.f32 %v510, 0.7978846
    %v543 = vmul.f32 %v511, 0.7978846
    %v544 = vmul.f32 %v512, 0.7978846
    %v545 = vmul.f32 %v513, 0.7978846
    %v546 = vmul.f32 %v514, 0.7978846
    %v547 = vmul.f32 %v515, 0.7978846
    %v548 = vmul.f32 %v516, 0.7978846
    %v549 = vmul.f32 %v517, 0.7978846
    %v550 = vmul.f32 %v518, 0.7978846
    %v551 = vmul.f32 %v519, 0.7978846
    %v552 = vmul.f32 %v520, 0.7978846
    %v553 = vmul.f32 %v521, 0.7978846
    %v554 = vmul.f32 %v522, 0.7978846
    %v555 = vmul.f32 %v523, 0.7978846
    %v556 = vmul.f32 %v524, 0.7978846
    %v557 = vmul.f32 %v525, 0.7978846
    %v558 = vmul.f32 %v526, 0.7978846
    %v559 = vtanh.pop %v527
    %v560 = vtanh.pop %v528
    %v561 = vtanh.pop %v529
    %v562 = vtanh.pop %v530
    %v563 = vtanh.pop %v531
    %v564 = vtanh.pop %v532
    %v565 = vtanh.pop %v533
    %v566 = vtanh.pop %v534
    %v567 = vtanh.pop %v535
    %v568 = vtanh.pop %v536
    %v569 = vtanh.pop %v537
    %v570 = vtanh.pop %v538
    %v571 = vtanh.pop %v539
    %v572 = vtanh.pop %v540
    %v573 = vtanh.pop %v541
    %v574 = vtanh.pop %v542
    %v575 = vtanh.pop %v543
    %v576 = vtanh.pop %v544
    %v577 = vtanh.pop %v545
    %v578 = vtanh.pop %v546
    %v579 = vtanh.pop %v547
    %v580 = vtanh.pop %v548
    %v581 = vtanh.pop %v549
    %v582 = vtanh.pop %v550
    %v583 = vtanh.pop %v551
    %v584 = vtanh.pop %v552
    %v585 = vtanh.pop %v553
    %v586 = vtanh.pop %v554
    %v587 = vtanh.pop %v555
    %v588 = vtanh.pop %v556
    %v589 = vtanh.pop %v557
    %v590 = vtanh.pop %v558
    %v591 = vadd.f32 %v559, 1.0
    %v592 = vadd.f32 %v560, 1.0
    %v593 = vadd.f32 %v561, 1.0
    %v594 = vadd.f32 %v562, 1.0
    %v595 = vadd.f32 %v563, 1.0
    %v596 = vadd.f32 %v564, 1.0
    %v597 = vadd.f32 %v565, 1.0
    %v598 = vadd.f32 %v566, 1.0
    %v599 = vadd.f32 %v567, 1.0
    %v600 = vadd.f32 %v568, 1.0
    %v601 = vadd.f32 %v569, 1.0
    %v602 = vadd.f32 %v570, 1.0
    %v603 = vadd.f32 %v571, 1.0
    %v604 = vadd.f32 %v572, 1.0
    %v605 = vadd.f32 %v573, 1.0
    %v606 = vadd.f32 %v574, 1.0
    %v607 = vadd.f32 %v575, 1.0
    %v608 = vadd.f32 %v576, 1.0
    %v609 = vadd.f32 %v577, 1.0
    %v610 = vadd.f32 %v578, 1.0
    %v611 = vadd.f32 %v579, 1.0
    %v612 = vadd.f32 %v580, 1.0
    %v613 = vadd.f32 %v581, 1.0
    %v614 = vadd.f32 %v582, 1.0
    %v615 = vadd.f32 %v583, 1.0
    %v616 = vadd.f32 %v584, 1.0
    %v617 = vadd.f32 %v585, 1.0
    %v618 = vadd.f32 %v586, 1.0
    %v619 = vadd.f32 %v587, 1.0
    %v620 = vadd.f32 %v588, 1.0
    %v621 = vadd.f32 %v589, 1.0
    %v622 = vadd.f32 %v590, 1.0
    %v623 = vmul.f32 %v367, %v591
    %v624 = vmul.f32 %v368, %v592
    %v625 = vmul.f32 %v369, %v593
    %v626 = vmul.f32 %v370, %v594
    %v627 = vmul.f32 %v371, %v595
    %v628 = vmul.f32 %v372, %v596
    %v629 = vmul.f32 %v373, %v597
    %v630 = vmul.f32 %v374, %v598
    %v631 = vmul.f32 %v375, %v599
    %v632 = vmul.f32 %v376, %v600
    %v633 = vmul.f32 %v377, %v601
    %v634 = vmul.f32 %v378, %v602
    %v635 = vmul.f32 %v379, %v603
    %v636 = vmul.f32 %v380, %v604
    %v637 = vmul.f32 %v381, %v605
    %v638 = vmul.f32 %v382, %v606
    %v639 = vmul.f32 %v383, %v607
    %v640 = vmul.f32 %v384, %v608
    %v641 = vmul.f32 %v385, %v609
    %v642 = vmul.f32 %v386, %v610
    %v643 = vmul.f32 %v387, %v611
    %v644 = vmul.f32 %v388, %v612
    %v645 = vmul.f32 %v389, %v613
    %v646 = vmul.f32 %v390, %v614
    %v647 = vmul.f32 %v391, %v615
    %v648 = vmul.f32 %v392, %v616
    %v649 = vmul.f32 %v393, %v617
    %v650 = vmul.f32 %v394, %v618
    %v651 = vmul.f32 %v395, %v619
    %v652 = vmul.f32 %v396, %v620
    %v653 = vmul.f32 %v397, %v621
    %v654 = vmul.f32 %v398, %v622
    %v655 = vld [vmem:[#allocation8] sm:$0xff]
    %v656 = vld [vmem:[#allocation8 + $0x8] sm:$0xff]
    %v657 = vld [vmem:[#allocation8 + $0x10] sm:$0xff]
    %v658 = vld [vmem:[#allocation8 + $0x18] sm:$0xff]
    %v659 = vld [vmem:[#allocation8 + $0x20] sm:$0xff]
    %v660 = vld [vmem:[#allocation8 + $0x28] sm:$0xff]
    %v661 = vld [vmem:[#allocation8 + $0x30] sm:$0xff]
    %v662 = vld [vmem:[#allocation8 + $0x38] sm:$0xff]
    %v663 = vld [vmem:[#allocation8 + $0x40] sm:$0xff]
    %v664 = vld [vmem:[#allocation8 + $0x48] sm:$0xff]
    %v665 = vld [vmem:[#allocation8 + $0x50] sm:$0xff]
    %v666 = vld [vmem:[#allocation8 + $0x58] sm:$0xff]
    %v667 = vld [vmem:[#allocation8 + $0x60] sm:$0xff]
    %v668 = vld [vmem:[#allocation8 + $0x68] sm:$0xff]
    %v669 = vld [vmem:[#allocation8 + $0x70] sm:$0xff]
    %v670 = vld [vmem:[#allocation8 + $0x78] sm:$0xff]
    %v687 = vunpack.c.l.b16 %v655
    %v688 = vunpack.c.h.b16 %v655
    %v689 = vunpack.c.l.b16 %v656
    %v690 = vunpack.c.h.b16 %v656
    %v691 = vunpack.c.l.b16 %v657
    %v692 = vunpack.c.h.b16 %v657
    %v693 = vunpack.c.l.b16 %v658
    %v694 = vunpack.c.h.b16 %v658
    %v695 = vunpack.c.l.b16 %v659
    %v696 = vunpack.c.h.b16 %v659
    %v697 = vunpack.c.l.b16 %v660
    %v698 = vunpack.c.h.b16 %v660
    %v699 = vunpack.c.l.b16 %v661
    %v700 = vunpack.c.h.b16 %v661
    %v701 = vunpack.c.l.b16 %v662
    %v702 = vunpack.c.h.b16 %v662
    %v703 = vunpack.c.l.b16 %v663
    %v704 = vunpack.c.h.b16 %v663
    %v705 = vunpack.c.l.b16 %v664
    %v706 = vunpack.c.h.b16 %v664
    %v707 = vunpack.c.l.b16 %v665
    %v708 = vunpack.c.h.b16 %v665
    %v709 = vunpack.c.l.b16 %v666
    %v710 = vunpack.c.h.b16 %v666
    %v711 = vunpack.c.l.b16 %v667
    %v712 = vunpack.c.h.b16 %v667
    %v713 = vunpack.c.l.b16 %v668
    %v714 = vunpack.c.h.b16 %v668
    %v715 = vunpack.c.l.b16 %v669
    %v716 = vunpack.c.h.b16 %v669
    %v717 = vunpack.c.l.b16 %v670
    %v718 = vunpack.c.h.b16 %v670
    %v719 = vpack.c.b16 %v689, %v687
    %v720 = vpack.c.b16 %v690, %v688
    %v721 = vpack.c.b16 %v693, %v691
    %v722 = vpack.c.b16 %v694, %v692
    %v723 = vpack.c.b16 %v697, %v695
    %v724 = vpack.c.b16 %v698, %v696
    %v725 = vpack.c.b16 %v701, %v699
    %v726 = vpack.c.b16 %v702, %v700
    %v727 = vpack.c.b16 %v705, %v703
    %v728 = vpack.c.b16 %v706, %v704
    %v729 = vpack.c.b16 %v709, %v707
    %v730 = vpack.c.b16 %v710, %v708
    %v731 = vpack.c.b16 %v713, %v711
    %v732 = vpack.c.b16 %v714, %v712
    %v733 = vpack.c.b16 %v717, %v715
    %v734 = vpack.c.b16 %v718, %v716
    %751 = vmatprep.subr.bf16.mxu0 %v720
    %752 = vmatpush1.bf16.msra.mxu0 %v719
    %753 = vmatprep.subr.bf16.mxu0 %v722
    %754 = vmatpush1.bf16.msra.mxu0 %v721
    %755 = vmatprep.subr.bf16.mxu0 %v724
    %756 = vmatpush1.bf16.msra.mxu0 %v723
    %757 = vmatprep.subr.bf16.mxu0 %v726
    %758 = vmatpush1.bf16.msra.mxu0 %v725
    %759 = vmatprep.subr.bf16.mxu0 %v728
    %760 = vmatpush1.bf16.msra.mxu0 %v727
    %761 = vmatprep.subr.bf16.mxu0 %v730
    %762 = vmatpush1.bf16.msra.mxu0 %v729
    %763 = vmatprep.subr.bf16.mxu0 %v732
    %764 = vmatpush1.bf16.msra.mxu0 %v731
    %765 = vmatprep.subr.bf16.mxu0 %v734
    %766 = vmatpush1.bf16.msra.mxu0 %v733
    %767 = vmatprep.subr.bf16.mxu0 0
    %768 = vmatpush1.bf16.msra.mxu0 0
    %769 = vmatprep.subr.bf16.mxu0 0
    %770 = vmatpush1.bf16.msra.mxu0 0
    %771 = vmatprep.subr.bf16.mxu0 0
    %772 = vmatpush1.bf16.msra.mxu0 0
    %773 = vmatprep.subr.bf16.mxu0 0
    %774 = vmatpush1.bf16.msra.mxu0 0
    %775 = vmatprep.subr.bf16.mxu0 0
    %776 = vmatpush1.bf16.msra.mxu0 0
    %777 = vmatprep.subr.bf16.mxu0 0
    %778 = vmatpush1.bf16.msra.mxu0 0
    %779 = vmatprep.subr.bf16.mxu0 0
    %780 = vmatpush1.bf16.msra.mxu0 0
    %781 = vmatprep.subr.bf16.mxu0 0
    %782 = vmatpush1.bf16.msra.mxu0 0
    %783 = vmatprep.mubr.bf16.mxu0 0
    %784 = vmatmul.mubr.bf16.gmra.mrb[0].mxu0 %v158
    %v785 = vpop.f32.mrb[0].mxu0
    %v786 = vadd.f32 0.0, %v785
    %v787 = vpop.f32.mrb[0].mxu0
    %v788 = vadd.f32 0.0, %v787
    %v789 = vpop.f32.mrb[0].mxu0
    %v790 = vadd.f32 0.0, %v789
    %v791 = vpop.f32.mrb[0].mxu0
    %v792 = vadd.f32 0.0, %v791
    %793 = vmatprep.mubr.bf16.mxu0 0
    %794 = vmatmul.mubr.bf16.gmra.mrb[0].mxu0 %v159
    %v795 = vpop.f32.mrb[0].mxu0
    %v796 = vadd.f32 0.0, %v795
    %v797 = vpop.f32.mrb[0].mxu0
    %v798 = vadd.f32 0.0, %v797
    %v799 = vpop.f32.mrb[0].mxu0
    %v800 = vadd.f32 0.0, %v799
    %v801 = vpop.f32.mrb[0].mxu0
    %v802 = vadd.f32 0.0, %v801
    %803 = vmatprep.mubr.bf16.mxu0 0
    %804 = vmatmul.mubr.bf16.gmra.mrb[0].mxu0 %v160
    %v805 = vpop.f32.mrb[0].mxu0
    %v806 = vadd.f32 0.0, %v805
    %v807 = vpop.f32.mrb[0].mxu0
    %v808 = vadd.f32 0.0, %v807
    %v809 = vpop.f32.mrb[0].mxu0
    %v810 = vadd.f32 0.0, %v809
    %v811 = vpop.f32.mrb[0].mxu0
    %v812 = vadd.f32 0.0, %v811
    %813 = vmatprep.mubr.bf16.mxu0 0
    %814 = vmatmul.mubr.bf16.gmra.mrb[0].mxu0 %v161
    %v815 = vpop.f32.mrb[0].mxu0
    %v816 = vadd.f32 0.0, %v815
    %v817 = vpop.f32.mrb[0].mxu0
    %v818 = vadd.f32 0.0, %v817
    %v819 = vpop.f32.mrb[0].mxu0
    %v820 = vadd.f32 0.0, %v819
    %v821 = vpop.f32.mrb[0].mxu0
    %v822 = vadd.f32 0.0, %v821
    %823 = vmatprep.mubr.bf16.mxu0 0
    %824 = vmatmul.mubr.bf16.gmra.mrb[0].mxu0 %v162
    %v825 = vpop.f32.mrb[0].mxu0
    %v826 = vadd.f32 0.0, %v825
    %v827 = vpop.f32.mrb[0].mxu0
    %v828 = vadd.f32 0.0, %v827
    %v829 = vpop.f32.mrb[0].mxu0
    %v830 = vadd.f32 0.0, %v829
    %v831 = vpop.f32.mrb[0].mxu0
    %v832 = vadd.f32 0.0, %v831
    %833 = vmatprep.mubr.bf16.mxu0 0
    %834 = vmatmul.mubr.bf16.gmra.mrb[0].mxu0 %v163
    %v835 = vpop.f32.mrb[0].mxu0
    %v836 = vadd.f32 0.0, %v835
    %v837 = vpop.f32.mrb[0].mxu0
    %v838 = vadd.f32 0.0, %v837
    %v839 = vpop.f32.mrb[0].mxu0
    %v840 = vadd.f32 0.0, %v839
    %v841 = vpop.f32.mrb[0].mxu0
    %v842 = vadd.f32 0.0, %v841
    %843 = vmatprep.mubr.bf16.mxu0 0
    %844 = vmatmul.mubr.bf16.gmra.mrb[0].mxu0 %v164
    %v845 = vpop.f32.mrb[0].mxu0
    %v846 = vadd.f32 0.0, %v845
    %v847 = vpop.f32.mrb[0].mxu0
    %v848 = vadd.f32 0.0, %v847
    %v849 = vpop.f32.mrb[0].mxu0
    %v850 = vadd.f32 0.0, %v849
    %v851 = vpop.f32.mrb[0].mxu0
    %v852 = vadd.f32 0.0, %v851
    %853 = vmatprep.mubr.bf16.mxu0 0
    %854 = vmatmul.mubr.bf16.gmra.mrb[0].mxu0 %v165
    %v855 = vpop.f32.mrb[0].mxu0
    %v856 = vadd.f32 0.0, %v855
    %v857 = vpop.f32.mrb[0].mxu0
    %v858 = vadd.f32 0.0, %v857
    %v859 = vpop.f32.mrb[0].mxu0
    %v860 = vadd.f32 0.0, %v859
    %v861 = vpop.f32.mrb[0].mxu0
    %v862 = vadd.f32 0.0, %v861
    %863 = vdwg.mxu0
    %v864 = vmul.f32 %v623, %v786
    %v865 = vmul.f32 %v624, %v788
    %v866 = vmul.f32 %v625, %v790
    %v867 = vmul.f32 %v626, %v792
    %v868 = vmul.f32 %v627, %v796
    %v869 = vmul.f32 %v628, %v798
    %v870 = vmul.f32 %v629, %v800
    %v871 = vmul.f32 %v630, %v802
    %v872 = vmul.f32 %v631, %v806
    %v873 = vmul.f32 %v632, %v808
    %v874 = vmul.f32 %v633, %v810
    %v875 = vmul.f32 %v634, %v812
    %v876 = vmul.f32 %v635, %v816
    %v877 = vmul.f32 %v636, %v818
    %v878 = vmul.f32 %v637, %v820
    %v879 = vmul.f32 %v638, %v822
    %v880 = vmul.f32 %v639, %v826
    %v881 = vmul.f32 %v640, %v828
    %v882 = vmul.f32 %v641, %v830
    %v883 = vmul.f32 %v642, %v832
    %v884 = vmul.f32 %v643, %v836
    %v885 = vmul.f32 %v644, %v838
    %v886 = vmul.f32 %v645, %v840
    %v887 = vmul.f32 %v646, %v842
    %v888 = vmul.f32 %v647, %v846
    %v889 = vmul.f32 %v648, %v848
    %v890 = vmul.f32 %v649, %v850
    %v891 = vmul.f32 %v650, %v852
    %v892 = vmul.f32 %v651, %v856
    %v893 = vmul.f32 %v652, %v858
    %v894 = vmul.f32 %v653, %v860
    %v895 = vmul.f32 %v654, %v862
    %v896 = vpack.c.bf16 %v866, %v864
    %v897 = vpack.c.bf16 %v867, %v865
    %v898 = vpack.c.bf16 %v870, %v868
    %v899 = vpack.c.bf16 %v871, %v869
    %v900 = vpack.c.bf16 %v874, %v872
    %v901 = vpack.c.bf16 %v875, %v873
    %v902 = vpack.c.bf16 %v878, %v876
    %v903 = vpack.c.bf16 %v879, %v877
    %v904 = vpack.c.bf16 %v882, %v880
    %v905 = vpack.c.bf16 %v883, %v881
    %v906 = vpack.c.bf16 %v886, %v884
    %v907 = vpack.c.bf16 %v887, %v885
    %v908 = vpack.c.bf16 %v890, %v888
    %v909 = vpack.c.bf16 %v891, %v889
    %v910 = vpack.c.bf16 %v894, %v892
    %v911 = vpack.c.bf16 %v895, %v893
    %v912 = vld [vmem:[#allocation2] sm:$0xff]
    %v913 = vld [vmem:[#allocation2 + $0x8] sm:$0xff]
    %v914 = vld [vmem:[#allocation2 + $0x10] sm:$0xff]
    %v915 = vld [vmem:[#allocation2 + $0x18] sm:$0xff]
    %v916 = vld [vmem:[#allocation2 + $0x20] sm:$0xff]
    %v917 = vld [vmem:[#allocation2 + $0x28] sm:$0xff]
    %v918 = vld [vmem:[#allocation2 + $0x30] sm:$0xff]
    %v919 = vld [vmem:[#allocation2 + $0x38] sm:$0xff]
    %v920 = vld [vmem:[#allocation2 + $0x40] sm:$0xff]
    %v921 = vld [vmem:[#allocation2 + $0x48] sm:$0xff]
    %v922 = vld [vmem:[#allocation2 + $0x50] sm:$0xff]
    %v923 = vld [vmem:[#allocation2 + $0x58] sm:$0xff]
    %v924 = vld [vmem:[#allocation2 + $0x60] sm:$0xff]
    %v925 = vld [vmem:[#allocation2 + $0x68] sm:$0xff]
    %v926 = vld [vmem:[#allocation2 + $0x70] sm:$0xff]
    %v927 = vld [vmem:[#allocation2 + $0x78] sm:$0xff]
    %v928 = vld [vmem:[#allocation9] sm:$0xf]
    %v929 = vld [vmem:[#allocation9 + $0x4] sm:$0xf]
    %v930 = vld [vmem:[#allocation9 + $0x8] sm:$0xf]
    %v931 = vld [vmem:[#allocation9 + $0xc] sm:$0xf]
    %v932 = vld [vmem:[#allocation9 + $0x10] sm:$0xf]
    %v933 = vld [vmem:[#allocation9 + $0x14] sm:$0xf]
    %v934 = vld [vmem:[#allocation9 + $0x18] sm:$0xf]
    %v935 = vld [vmem:[#allocation9 + $0x1c] sm:$0xf]
    %v936 = vld [vmem:[#allocation9 + $0x20] sm:$0xf]
    %v937 = vld [vmem:[#allocation9 + $0x24] sm:$0xf]
    %v938 = vld [vmem:[#allocation9 + $0x28] sm:$0xf]
    %v939 = vld [vmem:[#allocation9 + $0x2c] sm:$0xf]
    %v940 = vld [vmem:[#allocation9 + $0x30] sm:$0xf]
    %v941 = vld [vmem:[#allocation9 + $0x34] sm:$0xf]
    %v942 = vld [vmem:[#allocation9 + $0x38] sm:$0xf]
    %v943 = vld [vmem:[#allocation9 + $0x3c] sm:$0xf]
    %v944 = vld [vmem:[#allocation9 + $0x40] sm:$0xf]
    %v945 = vld [vmem:[#allocation9 + $0x44] sm:$0xf]
    %v946 = vld [vmem:[#allocation9 + $0x48] sm:$0xf]
    %v947 = vld [vmem:[#allocation9 + $0x4c] sm:$0xf]
    %v948 = vld [vmem:[#allocation9 + $0x50] sm:$0xf]
    %v949 = vld [vmem:[#allocation9 + $0x54] sm:$0xf]
    %v950 = vld [vmem:[#allocation9 + $0x58] sm:$0xf]
    %v951 = vld [vmem:[#allocation9 + $0x5c] sm:$0xf]
    %v952 = vld [vmem:[#allocation9 + $0x60] sm:$0xf]
    %v953 = vld [vmem:[#allocation9 + $0x64] sm:$0xf]
    %v954 = vld [vmem:[#allocation9 + $0x68] sm:$0xf]
    %v955 = vld [vmem:[#allocation9 + $0x6c] sm:$0xf]
    %v956 = vld [vmem:[#allocation9 + $0x70] sm:$0xf]
    %v957 = vld [vmem:[#allocation9 + $0x74] sm:$0xf]
    %v958 = vld [vmem:[#allocation9 + $0x78] sm:$0xf]
    %v959 = vld [vmem:[#allocation9 + $0x7c] sm:$0xf]
    %v992 = vunpack.c.l.b16 %v928
    %v993 = vunpack.c.l.b16 %v929
    %v994 = vunpack.c.l.b16 %v930
    %v995 = vunpack.c.l.b16 %v931
    %v996 = vunpack.c.l.b16 %v932
    %v997 = vunpack.c.l.b16 %v933
    %v998 = vunpack.c.l.b16 %v934
    %v999 = vunpack.c.l.b16 %v935
    %v1000 = vunpack.c.l.b16 %v936
    %v1001 = vunpack.c.l.b16 %v937
    %v1002 = vunpack.c.l.b16 %v938
    %v1003 = vunpack.c.l.b16 %v939
    %v1004 = vunpack.c.l.b16 %v940
    %v1005 = vunpack.c.l.b16 %v941
    %v1006 = vunpack.c.l.b16 %v942
    %v1007 = vunpack.c.l.b16 %v943
    %v1008 = vunpack.c.l.b16 %v944
    %v1009 = vunpack.c.l.b16 %v945
    %v1010 = vunpack.c.l.b16 %v946
    %v1011 = vunpack.c.l.b16 %v947
    %v1012 = vunpack.c.l.b16 %v948
    %v1013 = vunpack.c.l.b16 %v949
    %v1014 = vunpack.c.l.b16 %v950
    %v1015 = vunpack.c.l.b16 %v951
    %v1016 = vunpack.c.l.b16 %v952
    %v1017 = vunpack.c.l.b16 %v953
    %v1018 = vunpack.c.l.b16 %v954
    %v1019 = vunpack.c.l.b16 %v955
    %v1020 = vunpack.c.l.b16 %v956
    %v1021 = vunpack.c.l.b16 %v957
    %v1022 = vunpack.c.l.b16 %v958
    %v1023 = vunpack.c.l.b16 %v959
    %v1024 = vpack.c.b16 %v993, %v992
    %v1025 = vpack.c.b16 %v995, %v994
    %v1026 = vpack.c.b16 %v997, %v996
    %v1027 = vpack.c.b16 %v999, %v998
    %v1028 = vpack.c.b16 %v1001, %v1000
    %v1029 = vpack.c.b16 %v1003, %v1002
    %v1030 = vpack.c.b16 %v1005, %v1004
    %v1031 = vpack.c.b16 %v1007, %v1006
    %v1032 = vpack.c.b16 %v1009, %v1008
    %v1033 = vpack.c.b16 %v1011, %v1010
    %v1034 = vpack.c.b16 %v1013, %v1012
    %v1035 = vpack.c.b16 %v1015, %v1014
    %v1036 = vpack.c.b16 %v1017, %v1016
    %v1037 = vpack.c.b16 %v1019, %v1018
    %v1038 = vpack.c.b16 %v1021, %v1020
    %v1039 = vpack.c.b16 %v1023, %v1022
    %1056 = vmatprep.subr.bf16.mxu0 0
    %1057 = vmatpush1.bf16.msra.mxu0 %v1024
    %1058 = vmatprep.subr.bf16.mxu0 0
    %1059 = vmatpush1.bf16.msra.mxu0 %v1025
    %1060 = vmatprep.subr.bf16.mxu0 0
    %1061 = vmatpush1.bf16.msra.mxu0 %v1026
    %1062 = vmatprep.subr.bf16.mxu0 0
    %1063 = vmatpush1.bf16.msra.mxu0 %v1027
    %1064 = vmatprep.subr.bf16.mxu0 0
    %1065 = vmatpush1.bf16.msra.mxu0 %v1028
    %1066 = vmatprep.subr.bf16.mxu0 0
    %1067 = vmatpush1.bf16.msra.mxu0 %v1029
    %1068 = vmatprep.subr.bf16.mxu0 0
    %1069 = vmatpush1.bf16.msra.mxu0 %v1030
    %1070 = vmatprep.subr.bf16.mxu0 0
    %1071 = vmatpush1.bf16.msra.mxu0 %v1031
    %1072 = vmatprep.subr.bf16.mxu0 0
    %1073 = vmatpush1.bf16.msra.mxu0 %v1032
    %1074 = vmatprep.subr.bf16.mxu0 0
    %1075 = vmatpush1.bf16.msra.mxu0 %v1033
    %1076 = vmatprep.subr.bf16.mxu0 0
    %1077 = vmatpush1.bf16.msra.mxu0 %v1034
    %1078 = vmatprep.subr.bf16.mxu0 0
    %1079 = vmatpush1.bf16.msra.mxu0 %v1035
    %1080 = vmatprep.subr.bf16.mxu0 0
    %1081 = vmatpush1.bf16.msra.mxu0 %v1036
    %1082 = vmatprep.subr.bf16.mxu0 0
    %1083 = vmatpush1.bf16.msra.mxu0 %v1037
    %1084 = vmatprep.subr.bf16.mxu0 0
    %1085 = vmatpush1.bf16.msra.mxu0 %v1038
    %1086 = vmatprep.subr.bf16.mxu0 0
    %1087 = vmatpush1.bf16.msra.mxu0 %v1039
    %1088 = vmatprep.mubr.bf16.mxu0 %v897
    %1089 = vmatmul.mubr.bf16.gmra.mrb[0].mxu0 %v896
    %v1090 = vpop.f32.mrb[0].mxu0
    %v1091 = vadd.f32 0.0, %v1090
    %v1092 = vpop.f32.mrb[0].mxu0
    %v1093 = vpop.f32.mrb[0].mxu0
    %v1094 = vadd.f32 0.0, %v1093
    %v1095 = vpop.f32.mrb[0].mxu0
    %1096 = vmatprep.mubr.bf16.mxu0 %v899
    %1097 = vmatmul.mubr.bf16.gmra.mrb[0].mxu0 %v898
    %v1098 = vpop.f32.mrb[0].mxu0
    %v1099 = vadd.f32 0.0, %v1098
    %v1100 = vpop.f32.mrb[0].mxu0
    %v1101 = vpop.f32.mrb[0].mxu0
    %v1102 = vadd.f32 0.0, %v1101
    %v1103 = vpop.f32.mrb[0].mxu0
    %1104 = vmatprep.mubr.bf16.mxu0 %v901
    %1105 = vmatmul.mubr.bf16.gmra.mrb[0].mxu0 %v900
    %v1106 = vpop.f32.mrb[0].mxu0
    %v1107 = vadd.f32 0.0, %v1106
    %v1108 = vpop.f32.mrb[0].mxu0
    %v1109 = vpop.f32.mrb[0].mxu0
    %v1110 = vadd.f32 0.0, %v1109
    %v1111 = vpop.f32.mrb[0].mxu0
    %1112 = vmatprep.mubr.bf16.mxu0 %v903
    %1113 = vmatmul.mubr.bf16.gmra.mrb[0].mxu0 %v902
    %v1114 = vpop.f32.mrb[0].mxu0
    %v1115 = vadd.f32 0.0, %v1114
    %v1116 = vpop.f32.mrb[0].mxu0
    %v1117 = vpop.f32.mrb[0].mxu0
    %v1118 = vadd.f32 0.0, %v1117
    %v1119 = vpop.f32.mrb[0].mxu0
    %1120 = vmatprep.mubr.bf16.mxu0 %v905
    %1121 = vmatmul.mubr.bf16.gmra.mrb[0].mxu0 %v904
    %v1122 = vpop.f32.mrb[0].mxu0
    %v1123 = vadd.f32 0.0, %v1122
    %v1124 = vpop.f32.mrb[0].mxu0
    %v1125 = vpop.f32.mrb[0].mxu0
    %v1126 = vadd.f32 0.0, %v1125
    %v1127 = vpop.f32.mrb[0].mxu0
    %1128 = vmatprep.mubr.bf16.mxu0 %v907
    %1129 = vmatmul.mubr.bf16.gmra.mrb[0].mxu0 %v906
    %v1130 = vpop.f32.mrb[0].mxu0
    %v1131 = vadd.f32 0.0, %v1130
    %v1132 = vpop.f32.mrb[0].mxu0
    %v1133 = vpop.f32.mrb[0].mxu0
    %v1134 = vadd.f32 0.0, %v1133
    %v1135 = vpop.f32.mrb[0].mxu0
    %1136 = vmatprep.mubr.bf16.mxu0 %v909
    %1137 = vmatmul.mubr.bf16.gmra.mrb[0].mxu0 %v908
    %v1138 = vpop.f32.mrb[0].mxu0
    %v1139 = vadd.f32 0.0, %v1138
    %v1140 = vpop.f32.mrb[0].mxu0
    %v1141 = vpop.f32.mrb[0].mxu0
    %v1142 = vadd.f32 0.0, %v1141
    %v1143 = vpop.f32.mrb[0].mxu0
    %1144 = vmatprep.mubr.bf16.mxu0 %v911
    %1145 = vmatmul.mubr.bf16.gmra.mrb[0].mxu0 %v910
    %v1146 = vpop.f32.mrb[0].mxu0
    %v1147 = vadd.f32 0.0, %v1146
    %v1148 = vpop.f32.mrb[0].mxu0
    %v1149 = vpop.f32.mrb[0].mxu0
    %v1150 = vadd.f32 0.0, %v1149
    %v1151 = vpop.f32.mrb[0].mxu0
    %1152 = vdwg.mxu0
    %v1153 = vadd.f32 %v912, %v1091
    %v1154 = vadd.f32 %v913, %v1094
    %v1155 = vadd.f32 %v914, %v1099
    %v1156 = vadd.f32 %v915, %v1102
    %v1157 = vadd.f32 %v916, %v1107
    %v1158 = vadd.f32 %v917, %v1110
    %v1159 = vadd.f32 %v918, %v1115
    %v1160 = vadd.f32 %v919, %v1118
    %v1161 = vadd.f32 %v920, %v1123
    %v1162 = vadd.f32 %v921, %v1126
    %v1163 = vadd.f32 %v922, %v1131
    %v1164 = vadd.f32 %v923, %v1134
    %v1165 = vadd.f32 %v924, %v1139
    %v1166 = vadd.f32 %v925, %v1142
    %v1167 = vadd.f32 %v926, %v1147
    %v1168 = vadd.f32 %v927, %v1150
    %1169 = vst [vmem:[#allocation2] sm:$0xff] %v1153
    %1170 = vst [vmem:[#allocation2 + $0x8] sm:$0xff] %v1154
    %1171 = vst [vmem:[#allocation2 + $0x10] sm:$0xff] %v1155
    %1172 = vst [vmem:[#allocation2 + $0x18] sm:$0xff] %v1156
    %1173 = vst [vmem:[#allocation2 + $0x20] sm:$0xff] %v1157
    %1174 = vst [vmem:[#allocation2 + $0x28] sm:$0xff] %v1158
    %1175 = vst [vmem:[#allocation2 + $0x30] sm:$0xff] %v1159
    %1176 = vst [vmem:[#allocation2 + $0x38] sm:$0xff] %v1160
    %1177 = vst [vmem:[#allocation2 + $0x40] sm:$0xff] %v1161
    %1178 = vst [vmem:[#allocation2 + $0x48] sm:$0xff] %v1162
    %1179 = vst [vmem:[#allocation2 + $0x50] sm:$0xff] %v1163
    %1180 = vst [vmem:[#allocation2 + $0x58] sm:$0xff] %v1164
    %1181 = vst [vmem:[#allocation2 + $0x60] sm:$0xff] %v1165
    %1182 = vst [vmem:[#allocation2 + $0x68] sm:$0xff] %v1166
    %1183 = vst [vmem:[#allocation2 + $0x70] sm:$0xff] %v1167
    %1184 = vst [vmem:[#allocation2 + $0x78] sm:$0xff] %v1168
    // Predicated region
    $region38: #{tpu_custom_call.1} parent=1 // pred_check
      %p1185 = pneg %p74
    $region39: #{tpu_custom_call.1} parent=1 // pred_check_branch
      %1187 = sbr.rel (%p1185) target = $region41
    $region40: #{tpu_custom_call.1} parent=1 // pred_region
      %v1188 = vld [vmem:[#allocation2] sm:$0xff]
      %v1189 = vld [vmem:[#allocation2 + $0x8] sm:$0xff]
      %v1190 = vld [vmem:[#allocation2 + $0x10] sm:$0xff]
      %v1191 = vld [vmem:[#allocation2 + $0x18] sm:$0xff]
      %v1192 = vld [vmem:[#allocation2 + $0x20] sm:$0xff]
      %v1193 = vld [vmem:[#allocation2 + $0x28] sm:$0xff]
      %v1194 = vld [vmem:[#allocation2 + $0x30] sm:$0xff]
      %v1195 = vld [vmem:[#allocation2 + $0x38] sm:$0xff]
      %v1196 = vld [vmem:[#allocation2 + $0x40] sm:$0xff]
      %v1197 = vld [vmem:[#allocation2 + $0x48] sm:$0xff]
      %v1198 = vld [vmem:[#allocation2 + $0x50] sm:$0xff]
      %v1199 = vld [vmem:[#allocation2 + $0x58] sm:$0xff]
      %v1200 = vld [vmem:[#allocation2 + $0x60] sm:$0xff]
      %v1201 = vld [vmem:[#allocation2 + $0x68] sm:$0xff]
      %v1202 = vld [vmem:[#allocation2 + $0x70] sm:$0xff]
      %v1203 = vld [vmem:[#allocation2 + $0x78] sm:$0xff]
      %1204 = vst [vmem:[#allocation11] sm:$0xff] %v1188
      %1205 = vst [vmem:[#allocation11 + $0x8] sm:$0xff] %v1189
      %1206 = vst [vmem:[#allocation11 + $0x10] sm:$0xff] %v1190
      %1207 = vst [vmem:[#allocation11 + $0x18] sm:$0xff] %v1191
      %1208 = vst [vmem:[#allocation11 + $0x20] sm:$0xff] %v1192
      %1209 = vst [vmem:[#allocation11 + $0x28] sm:$0xff] %v1193
      %1210 = vst [vmem:[#allocation11 + $0x30] sm:$0xff] %v1194
      %1211 = vst [vmem:[#allocation11 + $0x38] sm:$0xff] %v1195
      %1212 = vst [vmem:[#allocation11 + $0x40] sm:$0xff] %v1196
      %1213 = vst [vmem:[#allocation11 + $0x48] sm:$0xff] %v1197
      %1214 = vst [vmem:[#allocation11 + $0x50] sm:$0xff] %v1198
      %1215 = vst [vmem:[#allocation11 + $0x58] sm:$0xff] %v1199
      %1216 = vst [vmem:[#allocation11 + $0x60] sm:$0xff] %v1200
      %1217 = vst [vmem:[#allocation11 + $0x68] sm:$0xff] %v1201
      %1218 = vst [vmem:[#allocation11 + $0x70] sm:$0xff] %v1202
      %1219 = vst [vmem:[#allocation11 + $0x78] sm:$0xff] %v1203
    $region41: #{tpu_custom_call.1} parent=1 // pred_fallthru
      _
    // Predicated region
    $region42: #{tpu_custom_call.1} parent=1 // pred_check
      _
    $region43: #{tpu_custom_call.1} parent=1 // pred_check_branch
      %1221 = sbr.rel (0) target = $region45
    $region44: #{tpu_custom_call.1} parent=1 // pred_region
      %s1223 = ssub.s32 2048, 2048
      %1224 = vsyncadd [#allocation5], %s1223
      %s1225 = sshll.u32 [#allocation11], 4
      %s1226 = int_to_ptr.vmem [resolvable:$true] %s1225
      %1231 = dma.vmem_to_hbm [thread:$0]  %s1226, 2048, %s4, [#allocation5], 128, 128, 8
    $region45: #{tpu_custom_call.1} parent=1 // pred_fallthru
      _
    // Predicated region
    $region46: #{tpu_custom_call.1} parent=1 // pred_check
      _
    $region47: #{tpu_custom_call.1} parent=1 // pred_check_branch
      %1233 = sbr.rel (0) target = $region49
    $region48: #{tpu_custom_call.1} parent=1 // pred_region
      %1234 = dma.done [#allocation5], 2048
    $region49: #{tpu_custom_call.1} parent=1 // pred_fallthru
      _
    %1235 = vsyncpa [#allocation4], 1
    %1236 = vsyncpa [#allocation7], 1
    %1237 = vsyncpa [#allocation10], 1
    %1238 = vsyncpa [#allocation5], 1

</llo_original>
